<compile_context>
chip_gen: v5e
topology: v5e:2x2
jax: 0.10.0
libtpu: 0.0.40
codegen_flags: <defaults>
</compile_context>

<pallas_src>
import math

import jax
import jax.numpy as jnp
from jax import lax
from jax.experimental import pallas as pl
from jax.experimental.pallas import tpu as pltpu

NEG_INF = -1e30


def _row_tile(n, max_tile=512):
    """Largest row-tile <= max_tile that divides n and is 8-aligned (or n)."""
    t = min(n, max_tile)
    for cand in range(t, 0, -1):
        if n % cand == 0 and (cand % 8 == 0 or cand == n):
            return cand
    return n


# ----------------------------------------------------------------------------
# Fused LayerNorm -> FFN (Linear/Swish/Linear) -> residual (+ optional LN)
# ----------------------------------------------------------------------------
def ffn_block(x2d, g, b, w1, b1, w2, b2, *, scale=0.5,
              final_g=None, final_b=None, eps=1e-5):
    N, D = x2d.shape
    Dff = w1.shape[1]
    tile = _row_tile(N)
    has_final = final_g is not None
    if not has_final:
        final_g = jnp.ones((1, D), jnp.float32)
        final_b = jnp.zeros((1, D), jnp.float32)

    def kernel(x_ref, g_ref, b_ref, w1_ref, b1_ref, w2_ref, b2_ref,
               fg_ref, fb_ref, o_ref):
        xv = x_ref[...].astype(jnp.float32)
        mu = jnp.mean(xv, axis=-1, keepdims=True)
        xc = xv - mu
        var = jnp.mean(xc * xc, axis=-1, keepdims=True)
        xn = xc * lax.rsqrt(var + eps) * g_ref[...] + b_ref[...]
        h = jnp.dot(xn.astype(w1_ref.dtype), w1_ref[...],
                    preferred_element_type=jnp.float32) + b1_ref[...]
        h = h * jax.nn.sigmoid(h)                      # Swish
        y = jnp.dot(h.astype(w2_ref.dtype), w2_ref[...],
                    preferred_element_type=jnp.float32) + b2_ref[...]
        y = xv + scale * y                              # residual
        if has_final:                                   # fused final LayerNorm
            mu2 = jnp.mean(y, axis=-1, keepdims=True)
            yc = y - mu2
            var2 = jnp.mean(yc * yc, axis=-1, keepdims=True)
            y = yc * lax.rsqrt(var2 + eps) * fg_ref[...] + fb_ref[...]
        o_ref[...] = y.astype(o_ref.dtype)

    resident = lambda i: (0, 0)
    return pl.pallas_call(
        kernel,
        out_shape=jax.ShapeDtypeStruct((N, D), x2d.dtype),
        grid=(N // tile,),
        in_specs=[
            pl.BlockSpec((tile, D), lambda i: (i, 0)),
            pl.BlockSpec((1, D), resident), pl.BlockSpec((1, D), resident),
            pl.BlockSpec((D, Dff), resident), pl.BlockSpec((1, Dff), resident),
            pl.BlockSpec((Dff, D), resident), pl.BlockSpec((1, D), resident),
            pl.BlockSpec((1, D), resident), pl.BlockSpec((1, D), resident),
        ],
        out_specs=pl.BlockSpec((tile, D), lambda i: (i, 0)),
        compiler_params=pltpu.CompilerParams(dimension_semantics=("parallel",)),
    )(x2d, g, b, w1, b1, w2, b2, final_g, final_b)


# ----------------------------------------------------------------------------
# Fully-fused relative-position multi-head attention block (one grid step per
# batch element):
#   LN -> QKV (single (D,3D) matmul) -> pos projection (P,D)@(D,D)
#   -> per-head (q+u)k^T and rel-shifted (q+v)P^T scores -> masked softmax
#   -> context -> output projection -> + residual.
# Single lane-dense (T, D) output store.
# ----------------------------------------------------------------------------
def attention_block(x3d, pos_enc, mask3, cmask, ln_g, ln_b,
                    w_qkv, b_qkv, wp, pos_u, pos_v, wo, bo,
                    num_heads, eps=1e-5):
    B, T, D = x3d.shape
    P = pos_enc.shape[1]          # 2T - 1
    H = num_heads
    dk = D // H
    scale = 1.0 / math.sqrt(dk)

    def kernel(x_ref, pe_ref, m_ref, cm_ref, g_ref, b_ref,
               wqkv_ref, bqkv_ref, wp_ref, u_ref, vb_ref, wo_ref, bo_ref,
               o_ref):
        xv = x_ref[0].astype(jnp.float32)                        # (T, D)
        mu = jnp.mean(xv, axis=-1, keepdims=True)
        xc = xv - mu
        var = jnp.mean(xc * xc, axis=-1, keepdims=True)
        xn = xc * lax.rsqrt(var + eps) * g_ref[...] + b_ref[...]

        # fused QKV projection (T, 3D) and positional projection (P, D) -> MXU
        qkv = jnp.dot(xn.astype(wqkv_ref.dtype), wqkv_ref[...],
                      preferred_element_type=jnp.float32) + bqkv_ref[...]
        pp = jnp.dot(pe_ref[0].astype(wp_ref.dtype), wp_ref[...],
                     preferred_element_type=jnp.float32)

        valid = (m_ref[0] > 0.5) & (cm_ref[...] > 0.5)           # (T, T)

        outs = []
        for h in range(H):                                       # static unroll
            s0, s1 = h * dk, (h + 1) * dk
            q_h = qkv[:, s0:s1]
            k_h = qkv[:, D + s0:D + s1]
            v_h = qkv[:, 2 * D + s0:2 * D + s1]
            p_h = pp[:, s0:s1]                                   # (P, dk)
            u = u_ref[:, s0:s1]                                  # (1, dk)
            vb = vb_ref[:, s0:s1]

            q_u = (q_h + u).astype(jnp.bfloat16)
            q_v = (q_h + vb).astype(jnp.bfloat16)

            # content score (q+u) k^T  -> MXU
            ac = lax.dot_general(q_u, k_h.astype(jnp.bfloat16),
                                 (((1,), (1,)), ((), ())),
                                 preferred_element_type=jnp.float32)   # (T, T)
            # positional score (q+v) P^T -> MXU, then rel-shift in-kernel
            bd_full = lax.dot_general(q_v, p_h.astype(jnp.bfloat16),
                                      (((1,), (1,)), ((), ())),
                                      preferred_element_type=jnp.float32)  # (T, P)
            # rel-shift: bd[i, j] = bd_full[i, (T-1) + j - i]  (static slices)
            # TODO(synk): for long T, replace the per-row static-slice unroll
            # with a lane-rotate (pltpu.roll with sublane stride) / flash-style
            # query-block tiling to avoid O(T) unrolled slices.
            bd = jnp.concatenate(
                [bd_full[i:i + 1, T - 1 - i:2 * T - 1 - i] for i in range(T)],
                axis=0)                                                # (T, T)

            scores = (ac + bd) * scale
            scores = jnp.where(valid, scores, NEG_INF)
            mrow = jnp.max(scores, axis=-1, keepdims=True)
            e = jnp.exp(scores - mrow)
            denom = jnp.sum(e, axis=-1, keepdims=True)
            attn = e * pl.reciprocal(denom, approx=True)
            attn = jnp.where(valid, attn, 0.0)

            ctx = jnp.dot(attn.astype(jnp.bfloat16), v_h.astype(jnp.bfloat16),
                          preferred_element_type=jnp.float32)          # (T, dk)
            outs.append(ctx)

        ctx_all = jnp.concatenate(outs, axis=-1)                       # (T, D)
        out = jnp.dot(ctx_all.astype(wo_ref.dtype), wo_ref[...],
                      preferred_element_type=jnp.float32) + bo_ref[...]
        o_ref[0] = (xv + out).astype(o_ref.dtype)                      # residual

    resident = lambda b: (0, 0)
    return pl.pallas_call(
        kernel,
        out_shape=jax.ShapeDtypeStruct((B, T, D), x3d.dtype),
        grid=(B,),
        in_specs=[
            pl.BlockSpec((1, T, D), lambda b: (b, 0, 0)),      # x (post macaron)
            pl.BlockSpec((1, P, D), lambda b: (b, 0, 0)),      # pos_enc
            pl.BlockSpec((1, 1, T), lambda b: (b, 0, 0)),      # key mask
            pl.BlockSpec((T, T), resident),                    # chunk mask
            pl.BlockSpec((1, D), resident), pl.BlockSpec((1, D), resident),
            pl.BlockSpec((D, 3 * D), resident),                # fused QKV weight
            pl.BlockSpec((1, 3 * D), resident),                # fused QKV bias
            pl.BlockSpec((D, D), resident),                    # linear_pos
            pl.BlockSpec((1, D), resident), pl.BlockSpec((1, D), resident),
            pl.BlockSpec((D, D), resident), pl.BlockSpec((1, D), resident),
        ],
        out_specs=pl.BlockSpec((1, T, D), lambda b: (b, 0, 0)),
        compiler_params=pltpu.CompilerParams(dimension_semantics=("parallel",)),
    )(x3d, pos_enc, mask3, cmask, ln_g, ln_b,
      w_qkv, b_qkv, wp, pos_u, pos_v, wo, bo)


# ----------------------------------------------------------------------------
# Fully-fused convolution module:
# LN -> pointwise(D->2D) -> GLU -> causal depthwise(K) -> BN(eval) -> Swish
# -> pointwise(D->D) -> + residual, one grid step per batch element.
# ----------------------------------------------------------------------------
def conv_module(x3d, g, b, pw1_w, pw1_b, dw_w, dw_b,
                bn_g, bn_b, bn_m, bn_v, pw2_w, pw2_b,
                eps_ln=1e-5, eps_bn=1e-5):
    B, T, D = x3d.shape
    K = dw_w.shape[0]
    twoD = pw1_w.shape[1]

    def kernel(x_ref, g_ref, b_ref, w1_ref, b1_ref, dw_ref, db_ref,
               bg_ref, bb_ref, bm_ref, bv_ref, w2_ref, b2_ref, o_ref):
        xv = x_ref[0].astype(jnp.float32)               # (T, D)
        mu = jnp.mean(xv, axis=-1, keepdims=True)
        xc = xv - mu
        var = jnp.mean(xc * xc, axis=-1, keepdims=True)
        xn = xc * lax.rsqrt(var + eps_ln) * g_ref[...] + b_ref[...]

        # pointwise conv1 (D -> 2D) + GLU over channels
        y = jnp.dot(xn.astype(w1_ref.dtype), w1_ref[...],
                    preferred_element_type=jnp.float32) + b1_ref[...]
        xg = y[:, :D] * jax.nn.sigmoid(y[:, D:])        # (T, D)

        # causal depthwise conv, accumulated in registers, written once.
        # TODO(synk): time-tiling for very long T would need a (K-1)-frame halo.
        if K > 1:
            xg_pad = jnp.concatenate(
                [jnp.zeros((K - 1, D), jnp.float32), xg], axis=0)  # (T+K-1, D)
        else:
            xg_pad = xg
        wv = dw_ref[...].astype(jnp.float32)            # (K, D)
        acc = jnp.zeros((T, D), jnp.float32)
        for kk in range(K):                             # static K unroll
            acc = acc + xg_pad[kk:kk + T, :] * wv[kk:kk + 1, :]
        z = acc + db_ref[...]

        # BatchNorm1d (eval, running stats) + Swish
        z = (z - bm_ref[...]) * lax.rsqrt(bv_ref[...] + eps_bn) * bg_ref[...] \
            + bb_ref[...]
        z = z * jax.nn.sigmoid(z)

        # pointwise conv2 (D -> D) + residual
        out = jnp.dot(z.astype(w2_ref.dtype), w2_ref[...],
                      preferred_element_type=jnp.float32) + b2_ref[...]
        o_ref[0] = (xv + out).astype(o_ref.dtype)

    resident = lambda i: (0, 0)
    return pl.pallas_call(
        kernel,
        out_shape=jax.ShapeDtypeStruct((B, T, D), x3d.dtype),
        grid=(B,),
        in_specs=[
            pl.BlockSpec((1, T, D), lambda i: (i, 0, 0)),
            pl.BlockSpec((1, D), resident), pl.BlockSpec((1, D), resident),
            pl.BlockSpec((D, twoD), resident), pl.BlockSpec((1, twoD), resident),
            pl.BlockSpec((K, D), resident), pl.BlockSpec((1, D), resident),
            pl.BlockSpec((1, D), resident), pl.BlockSpec((1, D), resident),
            pl.BlockSpec((1, D), resident), pl.BlockSpec((1, D), resident),
            pl.BlockSpec((D, D), resident), pl.BlockSpec((1, D), resident),
        ],
        out_specs=pl.BlockSpec((1, T, D), lambda i: (i, 0, 0)),
        compiler_params=pltpu.CompilerParams(dimension_semantics=("parallel",)),
    )(x3d, g, b, pw1_w, pw1_b, dw_w, dw_b, bn_g, bn_b, bn_m, bn_v, pw2_w, pw2_b)


# ----------------------------------------------------------------------------
# ChunkEncoderLayer.forward
# ----------------------------------------------------------------------------
def chunk_encoder_layer_forward(x, pos_enc, mask, chunk_mask, p):
    """x: (B,T,D); pos_enc: (B,2T-1,D); mask: (B,T); chunk_mask: (T,T) or None.
    Returns (x, mask, pos_enc).  dropout_rate = 0, BatchNorm in eval mode."""
    B, T, D = x.shape
    H = p["num_heads"]
    N = B * T
    wdt = jnp.bfloat16  # matmul weights in bf16, f32 accumulation

    x2 = x.reshape(N, D)

    # ---- macaron feed-forward (LN + FFN + 0.5*residual fused) ----------------
    x2 = ffn_block(x2, p["ln_mac_g"], p["ln_mac_b"],
                   p["ffm_w1"].astype(wdt), p["ffm_b1"],
                   p["ffm_w2"].astype(wdt), p["ffm_b2"], scale=0.5)

    # ---- relative-position multi-head self-attention (single fused kernel) ---
    w_qkv = jnp.concatenate([p["wq"], p["wk"], p["wv"]], axis=1).astype(wdt)
    b_qkv = jnp.concatenate([p["bq"], p["bk"], p["bv"]], axis=1)
    mask3 = mask.astype(jnp.float32).reshape(B, 1, T)
    cmask = (chunk_mask if chunk_mask is not None
             else jnp.ones((T, T), jnp.float32)).astype(jnp.float32)

    x3 = attention_block(x2.reshape(B, T, D), pos_enc, mask3, cmask,
                         p["ln_att_g"], p["ln_att_b"],
                         w_qkv, b_qkv, p["wp"].astype(wdt),
                         p["pos_u"], p["pos_v"],
                         p["wo"].astype(wdt), p["bo"], H)          # (B,T,D)

    # ---- convolution module (fully fused, + residual) -------------------------
    x3 = conv_module(x3, p["ln_conv_g"], p["ln_conv_b"],
                     p["pw1_w"].astype(wdt), p["pw1_b"], p["dw_w"], p["dw_b"],
                     p["bn_g"], p["bn_b"], p["bn_m"], p["bn_v"],
                     p["pw2_w"].astype(wdt), p["pw2_b"])
    x2 = x3.reshape(N, D)

    # ---- feed-forward + final LayerNorm (fused) --------------------------------
    x2 = ffn_block(x2, p["ln_ff_g"], p["ln_ff_b"],
                   p["ff_w1"].astype(wdt), p["ff_b1"],
                   p["ff_w2"].astype(wdt), p["ff_b2"], scale=0.5,
                   final_g=p["ln_fin_g"], final_b=p["ln_fin_b"])

    # TODO(synk): streaming paths (reset_streaming_cache / chunk_forward) and
    # train-mode BatchNorm / dropout are not part of this stateless forward.
    return x2.reshape(B, T, D), mask, pos_enc


# ----------------------------------------------------------------------------
# Deterministic parameter init (synthetic, matches module shapes)
# ----------------------------------------------------------------------------
def init_params(key, D, H, Dff, K):
    keys = jax.random.split(key, 24)
    it = iter(keys)

    def nrm(shape, s=0.1):
        return jax.random.normal(next(it), shape, jnp.float32) * s

    ones = lambda *s: jnp.ones(s, jnp.float32)
    zeros = lambda *s: jnp.zeros(s, jnp.float32)

    return {
        "num_heads": H,
        # layer norms (torch defaults)
        "ln_mac_g": ones(1, D), "ln_mac_b": zeros(1, D),
        "ln_att_g": ones(1, D), "ln_att_b": zeros(1, D),
        "ln_conv_g": ones(1, D), "ln_conv_b": zeros(1, D),
        "ln_ff_g": ones(1, D), "ln_ff_b": zeros(1, D),
        "ln_fin_g": ones(1, D), "ln_fin_b": zeros(1, D),
        # macaron FFN / FFN
        "ffm_w1": nrm((D, Dff)), "ffm_b1": zeros(1, Dff),
        "ffm_w2": nrm((Dff, D)), "ffm_b2": zeros(1, D),
        "ff_w1": nrm((D, Dff)), "ff_b1": zeros(1, Dff),
        "ff_w2": nrm((Dff, D)), "ff_b2": zeros(1, D),
        # relative-position MHA
        "wq": nrm((D, D)), "bq": zeros(1, D),
        "wk": nrm((D, D)), "bk": zeros(1, D),
        "wv": nrm((D, D)), "bv": zeros(1, D),
        "wo": nrm((D, D)), "bo": zeros(1, D),
        "wp": nrm((D, D)),                       # linear_pos (no bias)
        "pos_u": nrm((1, D)), "pos_v": nrm((1, D)),   # flattened (H*dk,)
        # conv module
        "pw1_w": nrm((D, 2 * D)), "pw1_b": zeros(1, 2 * D),
        "dw_w": nrm((K, D)), "dw_b": zeros(1, D),
        "bn_g": ones(1, D), "bn_b": zeros(1, D),
        "bn_m": zeros(1, D), "bn_v": ones(1, D),
        "pw2_w": nrm((D, D)), "pw2_b": zeros(1, D),
    }


if __name__ == "__main__":
    B, T, D, H, Dff, K = 2, 8, 32, 4, 64, 3   # K = conv_mod kernel size (causal)

    key = jax.random.PRNGKey(0)
    k1, k2, _ = jax.random.split(key, 3)
    x = jax.random.normal(k1, (B, T, D), jnp.float32)
    pos_enc = jax.random.normal(k2, (B, 2 * T - 1, D), jnp.float32)

    # source mask (B, T): last two frames of batch 1 are padding
    mask = jnp.ones((B, T), jnp.float32).at[1, 6:].set(0.0)
    # chunk mask (T, T): attend to own chunk (size 4) and previous chunks
    ci = jnp.arange(T) // 4
    chunk_mask = (ci[:, None] >= ci[None, :]).astype(jnp.float32)

    params = init_params(jax.random.PRNGKey(42), D, H, Dff, K)

    out, mask_out, pos_out = chunk_encoder_layer_forward(
        x, pos_enc, mask, chunk_mask, params)
    jax.block_until_ready(out)

    assert out.shape == (B, T, D) and mask_out.shape == (B, T)
    assert bool(jnp.all(jnp.isfinite(out)))
    print("KERNEL_OK")
</pallas_src>

<mosaic_0001>
module attributes {stable_mosaic.version = 11 : i64} {
  func.func @kernel(%arg0: i32, %arg1: memref<16x32xf32, #tpu.memory_space<vmem>>, %arg2: memref<1x32xf32, #tpu.memory_space<vmem>>, %arg3: memref<1x32xf32, #tpu.memory_space<vmem>>, %arg4: memref<32x64xbf16, #tpu.memory_space<vmem>>, %arg5: memref<1x64xf32, #tpu.memory_space<vmem>>, %arg6: memref<64x32xbf16, #tpu.memory_space<vmem>>, %arg7: memref<1x32xf32, #tpu.memory_space<vmem>>, %arg8: memref<1x32xf32, #tpu.memory_space<vmem>>, %arg9: memref<1x32xf32, #tpu.memory_space<vmem>>, %arg10: memref<16x32xf32, #tpu.memory_space<vmem>>) attributes {dimension_semantics = [#tpu.dimension_semantics<parallel>], iteration_bounds = array<i64: 1>, scalar_prefetch = 0 : i64, scratch_operands = 0 : i64, tpu.core_type = #tpu.core_type<tc>, window_params = [{transform_indices = @transform_0, window_bounds = array<i64: 16, 32>}, {pipeline_mode = #tpu.pipeline_mode<synchronous>, transform_indices = @transform_1, window_bounds = array<i64: 1, 32>}, {pipeline_mode = #tpu.pipeline_mode<synchronous>, transform_indices = @transform_2, window_bounds = array<i64: 1, 32>}, {pipeline_mode = #tpu.pipeline_mode<synchronous>, transform_indices = @transform_3, window_bounds = array<i64: 32, 64>}, {pipeline_mode = #tpu.pipeline_mode<synchronous>, transform_indices = @transform_4, window_bounds = array<i64: 1, 64>}, {pipeline_mode = #tpu.pipeline_mode<synchronous>, transform_indices = @transform_5, window_bounds = array<i64: 64, 32>}, {pipeline_mode = #tpu.pipeline_mode<synchronous>, transform_indices = @transform_6, window_bounds = array<i64: 1, 32>}, {pipeline_mode = #tpu.pipeline_mode<synchronous>, transform_indices = @transform_7, window_bounds = array<i64: 1, 32>}, {pipeline_mode = #tpu.pipeline_mode<synchronous>, transform_indices = @transform_8, window_bounds = array<i64: 1, 32>}, {transform_indices = @transform_9, window_bounds = array<i64: 16, 32>}]} {
    %c0 = arith.constant 0 : index
    %c0_0 = arith.constant 0 : index
    %0 = vector.load %arg1[%c0, %c0_0] : memref<16x32xf32, #tpu.memory_space<vmem>>, vector<16x32xf32>
    %cst = arith.constant dense<0.000000e+00> : vector<16xf32>
    %1 = vector.multi_reduction <add>, %0, %cst [1] : vector<16x32xf32> to vector<16xf32>
    %2 = vector.shape_cast %1 : vector<16xf32> to vector<16x1xf32>
    %cst_1 = arith.constant 3.200000e+01 : f32
    %3 = vector.broadcast %cst_1 : f32 to vector<16x1xf32>
    %4 = arith.divf %2, %3 : vector<16x1xf32>
    %5 = vector.broadcast %4 : vector<16x1xf32> to vector<16x32xf32>
    %6 = arith.subf %0, %5 : vector<16x32xf32>
    %7 = arith.mulf %6, %6 : vector<16x32xf32>
    %cst_2 = arith.constant dense<0.000000e+00> : vector<16xf32>
    %8 = vector.multi_reduction <add>, %7, %cst_2 [1] : vector<16x32xf32> to vector<16xf32>
    %9 = vector.shape_cast %8 : vector<16xf32> to vector<16x1xf32>
    %cst_3 = arith.constant 3.200000e+01 : f32
    %10 = vector.broadcast %cst_3 : f32 to vector<16x1xf32>
    %11 = arith.divf %9, %10 : vector<16x1xf32>
    %cst_4 = arith.constant 9.99999974E-6 : f32
    %12 = vector.broadcast %cst_4 : f32 to vector<16x1xf32>
    %13 = arith.addf %11, %12 : vector<16x1xf32>
    %14 = math.rsqrt %13 : vector<16x1xf32>
    %15 = vector.broadcast %14 : vector<16x1xf32> to vector<16x32xf32>
    %16 = arith.mulf %6, %15 : vector<16x32xf32>
    %c0_5 = arith.constant 0 : index
    %c0_6 = arith.constant 0 : index
    %17 = vector.load %arg2[%c0_5, %c0_6] : memref<1x32xf32, #tpu.memory_space<vmem>>, vector<1x32xf32>
    %18 = vector.broadcast %17 : vector<1x32xf32> to vector<16x32xf32>
    %19 = arith.mulf %16, %18 : vector<16x32xf32>
    %c0_7 = arith.constant 0 : index
    %c0_8 = arith.constant 0 : index
    %20 = vector.load %arg3[%c0_7, %c0_8] : memref<1x32xf32, #tpu.memory_space<vmem>>, vector<1x32xf32>
    %21 = vector.broadcast %20 : vector<1x32xf32> to vector<16x32xf32>
    %22 = arith.addf %19, %21 : vector<16x32xf32>
    %23 = arith.truncf %22 : vector<16x32xf32> to vector<16x32xbf16>
    %c0_9 = arith.constant 0 : index
    %c0_10 = arith.constant 0 : index
    %24 = vector.load %arg4[%c0_9, %c0_10] : memref<32x64xbf16, #tpu.memory_space<vmem>>, vector<32x64xbf16>
    %cst_11 = arith.constant dense<0.000000e+00> : vector<16x64xf32>
    %25 = tpu.matmul %23, %24, %cst_11 {dimension_numbers = #tpu.dot_dimension_numbers<[1], [0], [0], [1], [0, 0, 1, 1], [], []>} : vector<16x32xbf16>, vector<32x64xbf16>, vector<16x64xf32> -> vector<16x64xf32>
    %c0_12 = arith.constant 0 : index
    %c0_13 = arith.constant 0 : index
    %26 = vector.load %arg5[%c0_12, %c0_13] : memref<1x64xf32, #tpu.memory_space<vmem>>, vector<1x64xf32>
    %27 = vector.broadcast %26 : vector<1x64xf32> to vector<16x64xf32>
    %28 = arith.addf %25, %27 : vector<16x64xf32>
    %29 = arith.negf %28 : vector<16x64xf32>
    %30 = math.exp %29 : vector<16x64xf32>
    %cst_14 = arith.constant 1.000000e+00 : f32
    %31 = vector.broadcast %cst_14 : f32 to vector<16x64xf32>
    %32 = arith.addf %31, %30 : vector<16x64xf32>
    %33 = arith.divf %31, %32 : vector<16x64xf32>
    %34 = arith.mulf %28, %33 : vector<16x64xf32>
    %35 = arith.truncf %34 : vector<16x64xf32> to vector<16x64xbf16>
    %c0_15 = arith.constant 0 : index
    %c0_16 = arith.constant 0 : index
    %36 = vector.load %arg6[%c0_15, %c0_16] : memref<64x32xbf16, #tpu.memory_space<vmem>>, vector<64x32xbf16>
    %cst_17 = arith.constant dense<0.000000e+00> : vector<16x32xf32>
    %37 = tpu.matmul %35, %36, %cst_17 {dimension_numbers = #tpu.dot_dimension_numbers<[1], [0], [0], [1], [0, 0, 1, 1], [], []>} : vector<16x64xbf16>, vector<64x32xbf16>, vector<16x32xf32> -> vector<16x32xf32>
    %c0_18 = arith.constant 0 : index
    %c0_19 = arith.constant 0 : index
    %38 = vector.load %arg7[%c0_18, %c0_19] : memref<1x32xf32, #tpu.memory_space<vmem>>, vector<1x32xf32>
    %39 = vector.broadcast %38 : vector<1x32xf32> to vector<16x32xf32>
    %40 = arith.addf %37, %39 : vector<16x32xf32>
    %cst_20 = arith.constant 5.000000e-01 : f32
    %41 = vector.broadcast %cst_20 : f32 to vector<16x32xf32>
    %42 = arith.mulf %41, %40 : vector<16x32xf32>
    %43 = arith.addf %0, %42 : vector<16x32xf32>
    %c0_21 = arith.constant 0 : index
    %c0_22 = arith.constant 0 : index
    %44 = vector.load %arg10[%c0_21, %c0_22] : memref<16x32xf32, #tpu.memory_space<vmem>>, vector<16x32xf32>
    tpu.vector_store %arg10[%c0_21, %c0_22], %43 {strides = array<i32>} : memref<16x32xf32, #tpu.memory_space<vmem>>, vector<16x32xf32>,
    return
  }
  func.func @transform_0(%arg0: i32) -> (i32, i32) {
    %c0_i32 = arith.constant 0 : i32
    %c0_i32_0 = arith.constant 0 : i32
    return %arg0, %c0_i32 : i32, i32
  }
  func.func @transform_1(%arg0: i32) -> (i32, i32) {
    %c0_i32 = arith.constant 0 : i32
    %c0_i32_0 = arith.constant 0 : i32
    %c0_i32_1 = arith.constant 0 : i32
    return %c0_i32, %c0_i32_0 : i32, i32
  }
  func.func @transform_2(%arg0: i32) -> (i32, i32) {
    %c0_i32 = arith.constant 0 : i32
    %c0_i32_0 = arith.constant 0 : i32
    %c0_i32_1 = arith.constant 0 : i32
    return %c0_i32, %c0_i32_0 : i32, i32
  }
  func.func @transform_3(%arg0: i32) -> (i32, i32) {
    %c0_i32 = arith.constant 0 : i32
    %c0_i32_0 = arith.constant 0 : i32
    %c0_i32_1 = arith.constant 0 : i32
    return %c0_i32, %c0_i32_0 : i32, i32
  }
  func.func @transform_4(%arg0: i32) -> (i32, i32) {
    %c0_i32 = arith.constant 0 : i32
    %c0_i32_0 = arith.constant 0 : i32
    %c0_i32_1 = arith.constant 0 : i32
    return %c0_i32, %c0_i32_0 : i32, i32
  }
  func.func @transform_5(%arg0: i32) -> (i32, i32) {
    %c0_i32 = arith.constant 0 : i32
    %c0_i32_0 = arith.constant 0 : i32
    %c0_i32_1 = arith.constant 0 : i32
    return %c0_i32, %c0_i32_0 : i32, i32
  }
  func.func @transform_6(%arg0: i32) -> (i32, i32) {
    %c0_i32 = arith.constant 0 : i32
    %c0_i32_0 = arith.constant 0 : i32
    %c0_i32_1 = arith.constant 0 : i32
    return %c0_i32, %c0_i32_0 : i32, i32
  }
  func.func @transform_7(%arg0: i32) -> (i32, i32) {
    %c0_i32 = arith.constant 0 : i32
    %c0_i32_0 = arith.constant 0 : i32
    %c0_i32_1 = arith.constant 0 : i32
    return %c0_i32, %c0_i32_0 : i32, i32
  }
  func.func @transform_8(%arg0: i32) -> (i32, i32) {
    %c0_i32 = arith.constant 0 : i32
    %c0_i32_0 = arith.constant 0 : i32
    %c0_i32_1 = arith.constant 0 : i32
    return %c0_i32, %c0_i32_0 : i32, i32
  }
  func.func @transform_9(%arg0: i32) -> (i32, i32) {
    %c0_i32 = arith.constant 0 : i32
    %c0_i32_0 = arith.constant 0 : i32
    return %arg0, %c0_i32 : i32, i32
  }
}

</mosaic_0001>

<llo_original>
// kernel: tpu_custom_call.1
$region0: #{tpu_custom_call.1}
  #allocation0 [shape = 'u32[]', space=smem, size = 0x4, offset = 0x4, fixed_abs, tag = 'smem constant byte address 0x4 - core index']
  #allocation1 [shape = 'u32[72,128]{1,0:T(1,128)}', space=vmem, size = 0x9000, scoped, tag = 'internal scratch']
  %s0 = inlined_call_operand.vmem [shape: f32[16,32], index: 0, kind: input, shape index: {}]
  %s1 = inlined_call_operand.vmem [shape: f32[1,32], index: 1, kind: input, shape index: {}]
  %s2 = inlined_call_operand.vmem [shape: f32[1,32], index: 2, kind: input, shape index: {}]
  %s3 = inlined_call_operand.vmem [shape: bf16[32,64], index: 3, kind: input, shape index: {}]
  %s4 = inlined_call_operand.vmem [shape: f32[1,64], index: 4, kind: input, shape index: {}]
  %s5 = inlined_call_operand.vmem [shape: bf16[64,32], index: 5, kind: input, shape index: {}]
  %s6 = inlined_call_operand.vmem [shape: f32[1,32], index: 6, kind: input, shape index: {}]
  %s7 = inlined_call_operand.vmem [shape: f32[1,32], index: 7, kind: input, shape index: {}]
  %s8 = inlined_call_operand.vmem [shape: f32[1,32], index: 8, kind: input, shape index: {}]
  %s9 = inlined_call_operand.hbm [shape: f32[16,32], index: 9, kind: output, shape index: {}]
  %s10 = sld [smem:[#allocation0]]
  $region46: #{tpu_custom_call.1} parent=0
    _
  %s12 = ssub.s32 1, %s10
  %s13 = scalar_select 0, %s12, %s10
  $region1: #{tpu_custom_call.1} parent=0
    #allocation2 [shape = 'u8[8192]{0}', space=vmem, size = 0x2000, scoped, tag = 'output window, operand 0, single buffered']
    #allocation3 [shape = 's32[1]{0}', space=sflag, size = 0x4, scoped, tag = 'scoped memory for tpu_custom_call.1']
    %14 = vsyncpa [#allocation3], 0
    // Predicated region
    $region2: #{tpu_custom_call.1} parent=1 // pred_check
      _
    $region3: #{tpu_custom_call.1} parent=1 // pred_check_branch
      %16 = sbr.rel (0) target = $region5
    $region4: #{tpu_custom_call.1} parent=1 // pred_region
      _
    $region5: #{tpu_custom_call.1} parent=1 // pred_fallthru
      _
    // Predicated region
    $region6: #{tpu_custom_call.1} parent=1 // pred_check
      _
    $region7: #{tpu_custom_call.1} parent=1 // pred_check_branch
      %18 = sbr.rel (0) target = $region9
    $region8: #{tpu_custom_call.1} parent=1 // pred_region
      _
    $region9: #{tpu_custom_call.1} parent=1 // pred_fallthru
      _
    // Predicated region
    $region10: #{tpu_custom_call.1} parent=1 // pred_check
      _
    $region11: #{tpu_custom_call.1} parent=1 // pred_check_branch
      %20 = sbr.rel (0) target = $region13
    $region12: #{tpu_custom_call.1} parent=1 // pred_region
      _
    $region13: #{tpu_custom_call.1} parent=1 // pred_fallthru
      _
    // Predicated region
    $region14: #{tpu_custom_call.1} parent=1 // pred_check
      _
    $region15: #{tpu_custom_call.1} parent=1 // pred_check_branch
      %22 = sbr.rel (0) target = $region17
    $region16: #{tpu_custom_call.1} parent=1 // pred_region
      _
    $region17: #{tpu_custom_call.1} parent=1 // pred_fallthru
      _
    // Predicated region
    $region18: #{tpu_custom_call.1} parent=1 // pred_check
      _
    $region19: #{tpu_custom_call.1} parent=1 // pred_check_branch
      %24 = sbr.rel (0) target = $region21
    $region20: #{tpu_custom_call.1} parent=1 // pred_region
      _
    $region21: #{tpu_custom_call.1} parent=1 // pred_fallthru
      _
    // Predicated region
    $region22: #{tpu_custom_call.1} parent=1 // pred_check
      _
    $region23: #{tpu_custom_call.1} parent=1 // pred_check_branch
      %26 = sbr.rel (0) target = $region25
    $region24: #{tpu_custom_call.1} parent=1 // pred_region
      _
    $region25: #{tpu_custom_call.1} parent=1 // pred_fallthru
      _
    // Predicated region
    $region26: #{tpu_custom_call.1} parent=1 // pred_check
      _
    $region27: #{tpu_custom_call.1} parent=1 // pred_check_branch
      %28 = sbr.rel (0) target = $region29
    $region28: #{tpu_custom_call.1} parent=1 // pred_region
      _
    $region29: #{tpu_custom_call.1} parent=1 // pred_fallthru
      _
    // Predicated region
    $region30: #{tpu_custom_call.1} parent=1 // pred_check
      _
    $region31: #{tpu_custom_call.1} parent=1 // pred_check_branch
      %30 = sbr.rel (0) target = $region33
    $region32: #{tpu_custom_call.1} parent=1 // pred_region
      _
    $region33: #{tpu_custom_call.1} parent=1 // pred_fallthru
      _
    // Predicated region
    $region34: #{tpu_custom_call.1} parent=1 // pred_check
      _
    $region35: #{tpu_custom_call.1} parent=1 // pred_check_branch
      %32 = sbr.rel (0) target = $region37
    $region36: #{tpu_custom_call.1} parent=1 // pred_region
      _
    $region37: #{tpu_custom_call.1} parent=1 // pred_fallthru
      _
    %v34 = vld [vmem:[%s0] sm:$0xff]
    %v35 = vld [vmem:[%s0 + $0x8] sm:$0xff]
    %vm36 = vcmask 261120
    %v37 = vsel %vm36, %v34, 0.0
    %38 = vadd.xlane.f32.xlu0 %v37
    %v39 = vpop.xlane.xlu0 %38
    %v40 = vsel %vm36, %v35, 0.0
    %41 = vadd.xlane.f32.xlu0 %v40
    %v42 = vpop.xlane.xlu0 %41
    %v43 = vrcp.pop 32.0
    %v44 = vmul.f32 32.0, %v43
    %v45 = vsub.f32 1.0, %v44
    %v46 = vmul.f32 %v43, %v45
    %v47 = vadd.f32 %v43, %v46
    %vm48 = vweird.f32 %v43
    %v49 = vsel %vm48, %v43, %v47
    %v50 = vmul.f32 %v39, %v49
    %v51 = vmul.f32 %v42, %v49
    %v52 = vsub.f32 %v34, %v50
    %v53 = vsub.f32 %v35, %v51
    %v54 = vmul.f32 %v52, %v52
    %v55 = vmul.f32 %v53, %v53
    %v56 = vsel %vm36, %v54, 0.0
    %57 = vadd.xlane.f32.xlu0 %v56
    %v58 = vpop.xlane.xlu0 %57
    %v59 = vsel %vm36, %v55, 0.0
    %60 = vadd.xlane.f32.xlu0 %v59
    %v61 = vpop.xlane.xlu0 %60
    %v62 = vmul.f32 %v58, %v49
    %v63 = vmul.f32 %v61, %v49
    %v64 = vadd.f32 %v62, 1e-05
    %v65 = vadd.f32 %v63, 1e-05
    %v66 = vrsqrt.pop %v64
    %v67 = vmul.f32 %v66, %v64
    %v68 = vmul.f32 %v67, %v66
    %v69 = vmul.f32 0.5, %v68
    %v70 = vsub.f32 1.5, %v69
    %v71 = vmul.f32 %v66, %v70
    %vm72 = vweird.f32 %v64
    %vm73 = vweird.f32 %v66
    %vm74 = vmor %vm72, %vm73
    %v75 = vsel %vm74, %v66, %v71
    %v76 = vrsqrt.pop %v65
    %v77 = vmul.f32 %v76, %v65
    %v78 = vmul.f32 %v77, %v76
    %v79 = vmul.f32 0.5, %v78
    %v80 = vsub.f32 1.5, %v79
    %v81 = vmul.f32 %v76, %v80
    %vm82 = vweird.f32 %v65
    %vm83 = vweird.f32 %v76
    %vm84 = vmor %vm82, %vm83
    %v85 = vsel %vm84, %v76, %v81
    %v86 = vmul.f32 %v52, %v75
    %v87 = vmul.f32 %v53, %v85
    %v88 = vld [vmem:[%s1] sm:$0x1]
    %v90 = vperm.slane %v88, 0
    %v92 = vmul.f32 %v86, %v90
    %v93 = vmul.f32 %v87, %v90
    %v94 = vld [vmem:[%s2] sm:$0x1]
    %v96 = vperm.slane %v94, 0
    %v98 = vadd.f32 %v92, %v96
    %v99 = vadd.f32 %v93, %v96
    %v100 = vpack.c.bf16 %v99, %v98
    %v101 = vld [vmem:[%s3] sm:$0xf]
    %v102 = vld [vmem:[%s3 + $0x4] sm:$0xf]
    %v103 = vld [vmem:[%s3 + $0x8] sm:$0xf]
    %v104 = vld [vmem:[%s3 + $0xc] sm:$0xf]
    %v105 = vld [vmem:[%s4] sm:$0x1]
    %v107 = vperm.slane %v105, 0
    %v113 = vunpack.c.l.b16 %v101
    %v114 = vunpack.c.l.b16 %v102
    %v115 = vunpack.c.l.b16 %v103
    %v116 = vunpack.c.l.b16 %v104
    %v117 = vpack.c.b16 %v114, %v113
    %v118 = vpack.c.b16 %v116, %v115
    %v122 = vsel %vm36, %v100, 0
    %124 = vmatpush.bf16.msra.mxu0 0
    %125 = vmatpush.bf16.msra.mxu0 0
    %126 = vmatpush.bf16.msra.mxu0 0
    %127 = vmatpush.bf16.msra.mxu0 0
    %128 = vmatpush.bf16.msra.mxu0 0
    %129 = vmatpush.bf16.msra.mxu0 0
    %130 = vmatpush.bf16.msra.mxu0 %v118
    %131 = vmatpush.bf16.msra.mxu0 %v117
    %132 = vmatmul.bf16.gmra.mxu0 %v122
    %v133 = vpop.f32.mrf.mxu0
    %v134 = vadd.f32 %v107, %v133
    %v135 = vpop.f32.mrf.mxu0
    %v136 = vadd.f32 %v107, %v135
    %137 = vdwg.mxu0
    %v138 = vxor.u32 %v134, 2147483648
    %v139 = vxor.u32 %v136, 2147483648
    %v140 = vmul.f32 %v138, 1.442695
    %v141 = vpow.pop %v140
    %v142 = vmul.f32 %v139, 1.442695
    %v143 = vpow.pop %v142
    %v144 = vadd.f32 %v141, 1.0
    %v145 = vadd.f32 %v143, 1.0
    %v146 = vrcp.pop %v144
    %v147 = vmul.f32 %v144, %v146
    %v148 = vsub.f32 1.0, %v147
    %v149 = vmul.f32 %v146, %v148
    %v150 = vadd.f32 %v146, %v149
    %vm151 = vweird.f32 %v144
    %vm152 = vweird.f32 %v146
    %vm153 = vmor %vm151, %vm152
    %v154 = vsel %vm153, %v146, %v150
    %v155 = vand.u32 2147483647, %v144
    %vm156 = vcmp.eq.f32.partialorder %v155, 8.507059e+37
    %v157 = vand.u32 %v144, 2147483648
    %v158 = vor.u32 1.1754944e-38, %v157
    %v159 = vsel %vm156, %v158, %v154
    %v160 = vmul.f32 1.0, %v159
    %v161 = vrcp.pop %v145
    %v162 = vmul.f32 %v145, %v161
    %v163 = vsub.f32 1.0, %v162
    %v164 = vmul.f32 %v161, %v163
    %v165 = vadd.f32 %v161, %v164
    %vm166 = vweird.f32 %v145
    %vm167 = vweird.f32 %v161
    %vm168 = vmor %vm166, %vm167
    %v169 = vsel %vm168, %v161, %v165
    %v170 = vand.u32 2147483647, %v145
    %vm171 = vcmp.eq.f32.partialorder %v170, 8.507059e+37
    %v172 = vand.u32 %v145, 2147483648
    %v173 = vor.u32 1.1754944e-38, %v172
    %v174 = vsel %vm171, %v173, %v169
    %v175 = vmul.f32 1.0, %v174
    %v176 = vmul.f32 %v134, %v160
    %v177 = vmul.f32 %v136, %v175
    %v178 = vpack.c.bf16 %v177, %v176
    %v179 = vld [vmem:[%s5] sm:$0xf]
    %v180 = vld [vmem:[%s5 + $0x4] sm:$0xf]
    %v181 = vld [vmem:[%s5 + $0x8] sm:$0xf]
    %v182 = vld [vmem:[%s5 + $0xc] sm:$0xf]
    %v183 = vld [vmem:[%s5 + $0x10] sm:$0xf]
    %v184 = vld [vmem:[%s5 + $0x14] sm:$0xf]
    %v185 = vld [vmem:[%s5 + $0x18] sm:$0xf]
    %v186 = vld [vmem:[%s5 + $0x1c] sm:$0xf]
    %v187 = vld [vmem:[%s6] sm:$0x1]
    %v189 = vperm.slane %v187, 0
    %v199 = vunpack.c.l.b16 %v179
    %v200 = vunpack.c.l.b16 %v180
    %v201 = vunpack.c.l.b16 %v181
    %v202 = vunpack.c.l.b16 %v182
    %v203 = vunpack.c.l.b16 %v183
    %v204 = vunpack.c.l.b16 %v184
    %v205 = vunpack.c.l.b16 %v185
    %v206 = vunpack.c.l.b16 %v186
    %v207 = vpack.c.b16 %v200, %v199
    %v208 = vpack.c.b16 %v202, %v201
    %v209 = vpack.c.b16 %v204, %v203
    %v210 = vpack.c.b16 %v206, %v205
    %vm215 = vcmask 523264
    %v217 = vsel %vm215, %v178, 0
    %219 = vmatpush.bf16.msra.mxu0 0
    %220 = vmatpush.bf16.msra.mxu0 0
    %221 = vmatpush.bf16.msra.mxu0 0
    %222 = vmatpush.bf16.msra.mxu0 0
    %223 = vmatpush.bf16.msra.mxu0 %v210
    %224 = vmatpush.bf16.msra.mxu0 %v209
    %225 = vmatpush.bf16.msra.mxu0 %v208
    %226 = vmatpush.bf16.msra.mxu0 %v207
    %227 = vmatmul.bf16.gmra.mxu0 %v217
    %v228 = vpop.f32.mrf.mxu0
    %v229 = vadd.f32 %v189, %v228
    %v230 = vpop.f32.mrf.mxu0
    %v231 = vadd.f32 %v189, %v230
    %232 = vdwg.mxu0
    %v233 = vmul.f32 %v229, 0.5
    %v234 = vmul.f32 %v231, 0.5
    %v235 = vadd.f32 %v34, %v233
    %v236 = vadd.f32 %v35, %v234
    %237 = vst.msk [vmem:[#allocation2] sm:$0xff] %vm36, %v235
    %238 = vst.msk [vmem:[#allocation2 + $0x8] sm:$0xff] %vm36, %v236
    // Predicated region
    $region38: #{tpu_custom_call.1} parent=1 // pred_check
      _
    $region39: #{tpu_custom_call.1} parent=1 // pred_check_branch
      %240 = sbr.rel (0) target = $region41
    $region40: #{tpu_custom_call.1} parent=1 // pred_region
      %242 = vsyncadd [#allocation3], 0
      %s243 = sshll.u32 [#allocation2], 4
      %s244 = int_to_ptr.vmem [resolvable:$true] %s243
      %s245 = sshll.u32 %s9, 4
      %s246 = int_to_ptr.hbm [resolvable:$true] %s245
      %251 = dma.vmem_to_hbm [thread:$0]  %s244, 256, %s246, [#allocation3], 128, 128, 8
    $region41: #{tpu_custom_call.1} parent=1 // pred_fallthru
      _
    // Predicated region
    $region42: #{tpu_custom_call.1} parent=1 // pred_check
      _
    $region43: #{tpu_custom_call.1} parent=1 // pred_check_branch
      %253 = sbr.rel (0) target = $region45
    $region44: #{tpu_custom_call.1} parent=1 // pred_region
      %255 = dma.done [#allocation3], 256
    $region45: #{tpu_custom_call.1} parent=1 // pred_fallthru
      _
    %256 = vsyncpa [#allocation3], 1

</llo_original>
